<compile_context>
chip_gen: v6e
topology: v6e:2x2x1
jax: 0.10.0
libtpu: 0.0.40
codegen_flags: <defaults>
</compile_context>

<pallas_src>
import functools
import math

import jax
import jax.numpy as jnp
from jax import lax
from jax.experimental import pallas as pl
from jax.experimental.pallas import tpu as pltpu


def _round_up(n, m):
    return ((n + m - 1) // m) * m


def _choose_tiles(rows, channels, hw, itemsize, target_bytes=2 << 20):
    """Pick (row_tile, hw_tile) for the (B*C, HW) view.

    row_tile: multiple of lcm(channels, sublane packing) -> every block holds
    whole channel groups (exact gate) and the minor tile is sublane-dense.
    hw_tile: lane-dense multiple of 128 (capped at 1024).  Blocks target
    ~2 MiB so grid-step overhead is amortized while double-buffered in+out
    blocks + f32 temporaries fit comfortably in VMEM on v5e/v6e/v7x.
    """
    sublanes = {4: 8, 2: 16, 1: 32}.get(itemsize, 8)
    group = channels * sublanes // math.gcd(channels, sublanes)  # lcm
    hw_tile = min(_round_up(hw, 128), 1024)
    # Extremely wide channel groups: trade lanes for rows to bound the block.
    while group * hw_tile * itemsize > 8 * target_bytes and hw_tile > 128:
        hw_tile = max(128, _round_up(hw_tile // 2, 128))
    rows_wanted = max(1, target_bytes // (hw_tile * itemsize))
    row_tile = min(_round_up(rows_wanted, group), _round_up(rows, group))
    return row_tile, hw_tile


def _uniform_from_bits(bits_u32):
    """Top 24 bits of a uint32 -> float32 uniform in [0, 1)."""
    return (bits_u32 >> jnp.uint32(8)).astype(jnp.float32) * jnp.float32(
        1.0 / (1 << 24))


def _hash_bits(shape, seed32, block_id, salt):
    """Portable SplitMix32-style counter PRNG (plain jnp ops).

    Only used when the backend is not TPU (e.g. CPU interpret mode), where
    pltpu.prng_* has no lowering.  Quality is ample for N(0,1) noise.
    """
    r = lax.broadcasted_iota(jnp.uint32, shape, 0)
    c = lax.broadcasted_iota(jnp.uint32, shape, 1)
    idx = r * jnp.uint32(shape[1]) + c
    h = (idx
         + block_id.astype(jnp.uint32) * jnp.uint32(shape[0] * shape[1])
         + jnp.uint32(salt) * jnp.uint32(0x632BE59B)
         + seed32 * jnp.uint32(0x9E3779B9))
    h = h * jnp.uint32(0x9E3779B9)
    h = h ^ (h >> jnp.uint32(16))
    h = h * jnp.uint32(0x85EBCA6B)
    h = h ^ (h >> jnp.uint32(13))
    h = h * jnp.uint32(0xC2B2AE35)
    h = h ^ (h >> jnp.uint32(16))
    return h


def _add_gated_noise_kernel(seed_ref, x_ref, o_ref, *, std, channels,
                            use_tpu_prng):
    # seed_ref: (1,) int32 scalar-prefetch (SMEM).
    # x_ref / o_ref: (row_tile, hw_tile) blocks of the (B*C, HW) view.
    rows, hw = x_ref.shape            # static block shape
    groups = rows // channels         # whole channel groups per block
    half = rows // 2                  # rows is a multiple of 8 -> even
    block_id = pl.program_id(0) * pl.num_programs(1) + pl.program_id(1)

    # ---- random bits: hardware PRNG on TPU, portable hash elsewhere --------
    if use_tpu_prng:
        pltpu.prng_seed(seed_ref[0] * jnp.int32(1000003) + block_id)

        def draw_bits(shape, salt):
            del salt  # stateful stream advances between calls
            return pltpu.bitcast(pltpu.prng_random_bits(shape), jnp.uint32)
    else:
        seed32 = seed_ref[0].astype(jnp.uint32)

        def draw_bits(shape, salt):
            return _hash_bits(shape, seed32, block_id, salt)

    # ---- Box-Muller: two normals per (u1, u2) pair --------------------------
    # Halves PRNG draws and EUP transcendentals (log/sqrt + cos/sin for two
    # outputs) so the kernel stays memory-bound even at v7x HBM bandwidth.
    u1 = _uniform_from_bits(draw_bits((half, hw), 1)) + jnp.float32(
        0.5 / (1 << 24))                                   # (0, 1): log finite
    u2 = _uniform_from_bits(draw_bits((half, hw), 2))      # [0, 1)
    radius = jnp.sqrt(jnp.float32(-2.0) * jnp.log(u1))
    theta = jnp.float32(2.0 * math.pi) * u2
    noise = jnp.concatenate(
        [radius * jnp.cos(theta), radius * jnp.sin(theta)], axis=0)  # (rows,hw)

    # ---- gate = sigmoid(channel mean) in f32; tail in the input dtype -------
    # Lane dim untouched by the reshape, so it is layout-preserving.
    x3 = x_ref[...].reshape(groups, channels, hw)
    gate = jax.nn.sigmoid(
        jnp.mean(x3.astype(jnp.float32), axis=1, keepdims=True))   # (g,1,hw) f32
    scaled = (noise * jnp.float32(std)).astype(x3.dtype).reshape(
        groups, channels, hw)
    out = x3 + scaled * gate.astype(x3.dtype)
    o_ref[...] = out.reshape(rows, hw)


def add_gated_noise(x, *, std=0.1, training=True, seed=0):
    """x: (B, C, H, W). Noise is drawn in-kernel; gate = sigmoid(mean over C)."""
    if not training:
        return x
    B, C, H, W = x.shape
    HW = H * W
    R = B * C
    itemsize = jnp.dtype(x.dtype).itemsize

    row_tile, hw_tile = _choose_tiles(R, C, HW, itemsize)
    grid = (pl.cdiv(R, row_tile), pl.cdiv(HW, hw_tile))
    # Both axes "parallel" so a v7x megacore can shard them; for large inputs
    # the grid has >= 2 programs along these axes.  Ragged last blocks are
    # masked by Pallas (block starts are multiples of C, so garbage rows form
    # whole channel groups whose gate never touches valid outputs).

    # VMEM budget from the actual footprint: double-buffered in+out blocks
    # plus ~6 f32 block-sized temporaries plus margin; never below the 32 MiB
    # default, never above ~75% of v7x's 64 MiB per-TensorCore VMEM.
    block_elems = row_tile * hw_tile
    vmem_bytes = 4 * block_elems * itemsize + 6 * block_elems * 4 + (4 << 20)
    vmem_bytes = int(min(max(vmem_bytes, 32 << 20), 48 << 20))

    use_tpu_prng = jax.default_backend() == "tpu"

    xr = x.reshape(R, HW)                      # metadata-only reshape (no HBM pass)
    seed_arr = jnp.asarray([seed], dtype=jnp.int32)

    kernel = functools.partial(
        _add_gated_noise_kernel, std=float(std), channels=C,
        use_tpu_prng=use_tpu_prng)

    out = pl.pallas_call(
        kernel,
        out_shape=jax.ShapeDtypeStruct((R, HW), x.dtype),
        grid_spec=pltpu.PrefetchScalarGridSpec(
            num_scalar_prefetch=1,
            grid=grid,
            in_specs=[
                pl.BlockSpec((row_tile, hw_tile), lambda i, j, seed: (i, j)),
            ],
            out_specs=pl.BlockSpec((row_tile, hw_tile), lambda i, j, seed: (i, j)),
        ),
        compiler_params=pltpu.CompilerParams(
            dimension_semantics=("parallel", "parallel"),
            vmem_limit_bytes=vmem_bytes,
        ),
    )(seed_arr, xr)

    return out.reshape(B, C, H, W)


if __name__ == "__main__":
    key = jax.random.PRNGKey(0)
    std = 0.1

    # --- main check: shapes implied by the module (B=2, C=4, H=W=16) --------
    B, C, H, W = 2, 4, 16, 16
    x = jax.random.normal(key, (B, C, H, W), dtype=jnp.float32)

    out = add_gated_noise(x, std=std, training=True, seed=1234)
    out = jax.block_until_ready(out)
    assert out.shape == (B, C, H, W)
    assert bool(jnp.all(jnp.isfinite(out)))

    # Structural check: implied noise z = (out - x) / (std * gate) ~ N(0, 1),
    # with the gate computed the same way (channel mean + sigmoid).
    gate = jax.nn.sigmoid(jnp.mean(x, axis=1, keepdims=True))
    z = (out - x) / (std * gate)
    assert bool(jnp.all(jnp.isfinite(z)))
    assert abs(float(jnp.mean(z))) < 0.2, float(jnp.mean(z))
    assert abs(float(jnp.std(z)) - 1.0) < 0.25, float(jnp.std(z))

    # --- ragged shapes: no wrapper pad/slice; Pallas masks the last blocks ---
    B2, C2, H2, W2 = 3, 4, 10, 10
    x2 = jax.random.normal(jax.random.PRNGKey(1), (B2, C2, H2, W2),
                           dtype=jnp.float32)
    out2 = jax.block_until_ready(
        add_gated_noise(x2, std=std, training=True, seed=7))
    assert out2.shape == (B2, C2, H2, W2)
    assert bool(jnp.all(jnp.isfinite(out2)))
    gate2 = jax.nn.sigmoid(jnp.mean(x2, axis=1, keepdims=True))
    z2 = (out2 - x2) / (std * gate2)
    assert abs(float(jnp.mean(z2))) < 0.2, float(jnp.mean(z2))
    assert abs(float(jnp.std(z2)) - 1.0) < 0.25, float(jnp.std(z2))

    # --- eval mode is identity ------------------------------------------------
    out_eval = add_gated_noise(x, std=std, training=False)
    assert jnp.array_equal(out_eval, x)

    print("KERNEL_OK")
</pallas_src>

<mosaic_0001>
module attributes {stable_mosaic.version = 11 : i64} {
  func.func @_add_gated_noise_kernel(%arg0: i32, %arg1: i32, %arg2: memref<1xi32, #tpu.memory_space<smem>>, %arg3: memref<8x256xf32, #tpu.memory_space<vmem>>, %arg4: memref<8x256xf32, #tpu.memory_space<vmem>>) attributes {dimension_semantics = [#tpu.dimension_semantics<parallel>, #tpu.dimension_semantics<parallel>], iteration_bounds = array<i64: 1, 1>, scalar_prefetch = 1 : i64, scratch_operands = 0 : i64, tpu.core_type = #tpu.core_type<tc>, window_params = [{transform_indices = @transform_0, window_bounds = array<i64: 8, 256>}, {transform_indices = @transform_1, window_bounds = array<i64: 8, 256>}]} {
    %c1_i32 = arith.constant 1 : i32
    %0 = arith.muli %arg0, %c1_i32 : i32
    %1 = arith.addi %0, %arg1 : i32
    %c0 = arith.constant 0 : index
    %2 = memref.load %arg2[%c0] : memref<1xi32, #tpu.memory_space<smem>>
    %3 = tpu.iota {dimensions = array<i32: 0>} : vector<4x256xi32>
    %4 = tpu.iota {dimensions = array<i32: 1>} : vector<4x256xi32>
    %c256_i32 = arith.constant 256 : i32
    %5 = vector.broadcast %c256_i32 : i32 to vector<4x256xi32>
    %6 = arith.muli %3, %5 : vector<4x256xi32>
    %7 = arith.addi %6, %4 : vector<4x256xi32>
    %c1024_i32 = arith.constant 1024 : i32
    %8 = arith.muli %1, %c1024_i32 : i32
    %9 = vector.broadcast %8 : i32 to vector<4x256xi32>
    %10 = arith.addi %7, %9 : vector<4x256xi32>
    %c1_i32_0 = arith.constant 1 : i32
    %c1663821211_i32 = arith.constant 1663821211 : i32
    %11 = arith.muli %c1_i32_0, %c1663821211_i32 : i32
    %12 = vector.broadcast %11 : i32 to vector<4x256xi32>
    %13 = arith.addi %10, %12 : vector<4x256xi32>
    %c-1640531527_i32 = arith.constant -1640531527 : i32
    %14 = arith.muli %2, %c-1640531527_i32 : i32
    %15 = vector.broadcast %14 : i32 to vector<4x256xi32>
    %16 = arith.addi %13, %15 : vector<4x256xi32>
    %c-1640531527_i32_1 = arith.constant -1640531527 : i32
    %17 = vector.broadcast %c-1640531527_i32_1 : i32 to vector<4x256xi32>
    %18 = arith.muli %16, %17 : vector<4x256xi32>
    %c16_i32 = arith.constant 16 : i32
    %19 = vector.broadcast %c16_i32 : i32 to vector<4x256xi32>
    %20 = arith.shrui %18, %19 : vector<4x256xi32>
    %21 = arith.xori %18, %20 : vector<4x256xi32>
    %c-2048144789_i32 = arith.constant -2048144789 : i32
    %22 = vector.broadcast %c-2048144789_i32 : i32 to vector<4x256xi32>
    %23 = arith.muli %21, %22 : vector<4x256xi32>
    %c13_i32 = arith.constant 13 : i32
    %24 = vector.broadcast %c13_i32 : i32 to vector<4x256xi32>
    %25 = arith.shrui %23, %24 : vector<4x256xi32>
    %26 = arith.xori %23, %25 : vector<4x256xi32>
    %c-1028477387_i32 = arith.constant -1028477387 : i32
    %27 = vector.broadcast %c-1028477387_i32 : i32 to vector<4x256xi32>
    %28 = arith.muli %26, %27 : vector<4x256xi32>
    %c16_i32_2 = arith.constant 16 : i32
    %29 = vector.broadcast %c16_i32_2 : i32 to vector<4x256xi32>
    %30 = arith.shrui %28, %29 : vector<4x256xi32>
    %31 = arith.xori %28, %30 : vector<4x256xi32>
    %c8_i32 = arith.constant 8 : i32
    %32 = vector.broadcast %c8_i32 : i32 to vector<4x256xi32>
    %33 = arith.shrui %31, %32 : vector<4x256xi32>
    %34 = arith.uitofp %33 : vector<4x256xi32> to vector<4x256xf32>
    %cst = arith.constant 5.96046448E-8 : f32
    %35 = vector.broadcast %cst : f32 to vector<4x256xf32>
    %36 = arith.mulf %34, %35 : vector<4x256xf32>
    %cst_3 = arith.constant 2.98023224E-8 : f32
    %37 = vector.broadcast %cst_3 : f32 to vector<4x256xf32>
    %38 = arith.addf %36, %37 : vector<4x256xf32>
    %39 = tpu.iota {dimensions = array<i32: 0>} : vector<4x256xi32>
    %40 = tpu.iota {dimensions = array<i32: 1>} : vector<4x256xi32>
    %c256_i32_4 = arith.constant 256 : i32
    %41 = vector.broadcast %c256_i32_4 : i32 to vector<4x256xi32>
    %42 = arith.muli %39, %41 : vector<4x256xi32>
    %43 = arith.addi %42, %40 : vector<4x256xi32>
    %c1024_i32_5 = arith.constant 1024 : i32
    %44 = arith.muli %1, %c1024_i32_5 : i32
    %45 = vector.broadcast %44 : i32 to vector<4x256xi32>
    %46 = arith.addi %43, %45 : vector<4x256xi32>
    %c2_i32 = arith.constant 2 : i32
    %c1663821211_i32_6 = arith.constant 1663821211 : i32
    %47 = arith.muli %c2_i32, %c1663821211_i32_6 : i32
    %48 = vector.broadcast %47 : i32 to vector<4x256xi32>
    %49 = arith.addi %46, %48 : vector<4x256xi32>
    %c-1640531527_i32_7 = arith.constant -1640531527 : i32
    %50 = arith.muli %2, %c-1640531527_i32_7 : i32
    %51 = vector.broadcast %50 : i32 to vector<4x256xi32>
    %52 = arith.addi %49, %51 : vector<4x256xi32>
    %c-1640531527_i32_8 = arith.constant -1640531527 : i32
    %53 = vector.broadcast %c-1640531527_i32_8 : i32 to vector<4x256xi32>
    %54 = arith.muli %52, %53 : vector<4x256xi32>
    %c16_i32_9 = arith.constant 16 : i32
    %55 = vector.broadcast %c16_i32_9 : i32 to vector<4x256xi32>
    %56 = arith.shrui %54, %55 : vector<4x256xi32>
    %57 = arith.xori %54, %56 : vector<4x256xi32>
    %c-2048144789_i32_10 = arith.constant -2048144789 : i32
    %58 = vector.broadcast %c-2048144789_i32_10 : i32 to vector<4x256xi32>
    %59 = arith.muli %57, %58 : vector<4x256xi32>
    %c13_i32_11 = arith.constant 13 : i32
    %60 = vector.broadcast %c13_i32_11 : i32 to vector<4x256xi32>
    %61 = arith.shrui %59, %60 : vector<4x256xi32>
    %62 = arith.xori %59, %61 : vector<4x256xi32>
    %c-1028477387_i32_12 = arith.constant -1028477387 : i32
    %63 = vector.broadcast %c-1028477387_i32_12 : i32 to vector<4x256xi32>
    %64 = arith.muli %62, %63 : vector<4x256xi32>
    %c16_i32_13 = arith.constant 16 : i32
    %65 = vector.broadcast %c16_i32_13 : i32 to vector<4x256xi32>
    %66 = arith.shrui %64, %65 : vector<4x256xi32>
    %67 = arith.xori %64, %66 : vector<4x256xi32>
    %c8_i32_14 = arith.constant 8 : i32
    %68 = vector.broadcast %c8_i32_14 : i32 to vector<4x256xi32>
    %69 = arith.shrui %67, %68 : vector<4x256xi32>
    %70 = arith.uitofp %69 : vector<4x256xi32> to vector<4x256xf32>
    %cst_15 = arith.constant 5.96046448E-8 : f32
    %71 = vector.broadcast %cst_15 : f32 to vector<4x256xf32>
    %72 = arith.mulf %70, %71 : vector<4x256xf32>
    %73 = math.log %38 : vector<4x256xf32>
    %cst_16 = arith.constant -2.000000e+00 : f32
    %74 = vector.broadcast %cst_16 : f32 to vector<4x256xf32>
    %75 = arith.mulf %74, %73 : vector<4x256xf32>
    %76 = math.sqrt %75 : vector<4x256xf32>
    %cst_17 = arith.constant 6.28318548 : f32
    %77 = vector.broadcast %cst_17 : f32 to vector<4x256xf32>
    %78 = arith.mulf %77, %72 : vector<4x256xf32>
    %79 = math.cos %78 : vector<4x256xf32>
    %80 = arith.mulf %76, %79 : vector<4x256xf32>
    %81 = math.sin %78 : vector<4x256xf32>
    %82 = arith.mulf %76, %81 : vector<4x256xf32>
    %83 = tpu.concatenate %80, %82 in 0 : vector<4x256xf32>, vector<4x256xf32> -> vector<8x256xf32>
    %c0_18 = arith.constant 0 : index
    %c0_19 = arith.constant 0 : index
    %84 = vector.load %arg3[%c0_18, %c0_19] : memref<8x256xf32, #tpu.memory_space<vmem>>, vector<8x256xf32>
    %85 = vector.shape_cast %84 : vector<8x256xf32> to vector<2x4x256xf32>
    %cst_20 = arith.constant dense<0.000000e+00> : vector<2x256xf32>
    %86 = vector.multi_reduction <add>, %85, %cst_20 [1] : vector<2x4x256xf32> to vector<2x256xf32>
    %87 = vector.shape_cast %86 : vector<2x256xf32> to vector<2x1x256xf32>
    %cst_21 = arith.constant 4.000000e+00 : f32
    %88 = vector.broadcast %cst_21 : f32 to vector<2x1x256xf32>
    %89 = arith.divf %87, %88 : vector<2x1x256xf32>
    %90 = arith.negf %89 : vector<2x1x256xf32>
    %91 = math.exp %90 : vector<2x1x256xf32>
    %cst_22 = arith.constant 1.000000e+00 : f32
    %92 = vector.broadcast %cst_22 : f32 to vector<2x1x256xf32>
    %93 = arith.addf %92, %91 : vector<2x1x256xf32>
    %94 = arith.divf %92, %93 : vector<2x1x256xf32>
    %cst_23 = arith.constant 1.000000e-01 : f32
    %95 = vector.broadcast %cst_23 : f32 to vector<8x256xf32>
    %96 = arith.mulf %83, %95 : vector<8x256xf32>
    %97 = vector.shape_cast %96 : vector<8x256xf32> to vector<2x4x256xf32>
    %98 = vector.broadcast %94 : vector<2x1x256xf32> to vector<2x4x256xf32>
    %99 = arith.mulf %97, %98 : vector<2x4x256xf32>
    %100 = arith.addf %85, %99 : vector<2x4x256xf32>
    %101 = vector.shape_cast %100 : vector<2x4x256xf32> to vector<8x256xf32>
    %c0_24 = arith.constant 0 : index
    %c0_25 = arith.constant 0 : index
    %102 = vector.load %arg4[%c0_24, %c0_25] : memref<8x256xf32, #tpu.memory_space<vmem>>, vector<8x256xf32>
    tpu.vector_store %arg4[%c0_24, %c0_25], %101 {strides = array<i32>} : memref<8x256xf32, #tpu.memory_space<vmem>>, vector<8x256xf32>,
    return
  }
  func.func @transform_0(%arg0: i32, %arg1: i32, %arg2: memref<1xi32, #tpu.memory_space<smem>>) -> (i32, i32) {
    %c0_i32 = arith.constant 0 : i32
    return %arg0, %arg1 : i32, i32
  }
  func.func @transform_1(%arg0: i32, %arg1: i32, %arg2: memref<1xi32, #tpu.memory_space<smem>>) -> (i32, i32) {
    %c0_i32 = arith.constant 0 : i32
    return %arg0, %arg1 : i32, i32
  }
}

</mosaic_0001>

<llo_original>
// kernel: tpu_custom_call.1
$region0: #{tpu_custom_call.1}
  #allocation0 [shape = 'u32[]', space=smem, size = 0x4, offset = 0x4, fixed_abs, tag = 'smem constant byte address 0x4 - core index']
  #allocation1 [shape = 'u32[144,128]{1,0:T(1,128)}', space=vmem, size = 0x12000, scoped, tag = 'internal scratch']
  #allocation2 [shape = 's32[1]{0}', space=sflag, size = 0x4, scoped, tag = 'scoped memory for tpu_custom_call.1']
  #allocation3 [shape = 's32[1]{0:T(128)S(6)}', space=smem, size = 0x200, scoped, tag = 'prefetched SMEM operand 0']
  %s0 = inlined_call_operand.<no memory space> [shape: s32[1], index: 0, kind: input, shape index: {}]
  %s1 = inlined_call_operand.hbm [shape: f32[8,256], index: 1, kind: input, shape index: {}]
  %s2 = inlined_call_operand.hbm [shape: f32[8,256], index: 2, kind: output, shape index: {}]
  %s3 = sld [smem:[#allocation0]]
  $region18: #{tpu_custom_call.1} parent=0
    _
  %s5 = ssub.s32 1, %s3
  %s6 = scalar_select 0, %s5, %s3
  %7 = sst [smem:[#allocation3]] %s0
  $region1: #{tpu_custom_call.1} parent=0
    #allocation4 [shape = 'u8[8192]{0}', space=vmem, size = 0x2000, scoped, tag = 'input window, operand 1, single buffered']
    #allocation5 [shape = 's32[1]{0}', space=sflag, size = 0x4, scoped, tag = 'scoped memory for tpu_custom_call.1']
    #allocation6 [shape = 's32[1]{0}', space=sflag, size = 0x4, scoped, tag = 'scoped memory for tpu_custom_call.1']
    #allocation7 [shape = 'u8[8192]{0}', space=vmem, size = 0x2000, scoped, tag = 'output window, operand 0, single buffered']
    %8 = vsyncpa [#allocation5], 0
    %9 = vsyncpa [#allocation6], 0
    // Predicated region
    $region2: #{tpu_custom_call.1} parent=1 // pred_check
      _
    $region3: #{tpu_custom_call.1} parent=1 // pred_check_branch
      %11 = sbr.rel (0) target = $region5
    $region4: #{tpu_custom_call.1} parent=1 // pred_region
      %s13 = ssub.s32 256, 256
      %14 = vsyncadd [#allocation5], %s13
      %s16 = sshll.u32 [#allocation4], 4
      %s17 = int_to_ptr.vmem [resolvable:$true] %s16
      %19 = dma.hbm_to_vmem [thread:$0]  %s1, 256, %s17, [#allocation5]
    $region5: #{tpu_custom_call.1} parent=1 // pred_fallthru
      _
    // Predicated region
    $region6: #{tpu_custom_call.1} parent=1 // pred_check
      _
    $region7: #{tpu_custom_call.1} parent=1 // pred_check_branch
      %21 = sbr.rel (0) target = $region9
    $region8: #{tpu_custom_call.1} parent=1 // pred_region
      %22 = dma.done [#allocation5], 256
    $region9: #{tpu_custom_call.1} parent=1 // pred_fallthru
      _
    %s23 = sadd.s32 0, 0
    %s24 = sld [smem:[#allocation3]]
    %v25 = vlaneseq
    %v26 = vshrl.u32 %v25, 7
    %v27 = vlaneseq
    %v28 = vand.u32 %v27, 127
    %v29 = vadd.s32 %v28, 128
    %v30 = vmul.u32 %v26, 256
    %v31 = vadd.s32 %v30, %v28
    %v32 = vadd.s32 %v30, %v29
    %s33 = smul.u32 %s23, 1024
    %v34 = vstv %s33
    %v35 = vadd.s32 %v31, %v34
    %v36 = vadd.s32 %v32, %v34
    %v37 = vadd.s32 %v35, 1663821211
    %v38 = vadd.s32 %v36, 1663821211
    %s39 = smul.u32 %s24, 2654435769
    %v40 = vstv %s39
    %v41 = vadd.s32 %v37, %v40
    %v42 = vadd.s32 %v38, %v40
    %v43 = vmul.u32 %v41, 2654435769
    %v44 = vmul.u32 %v42, 2654435769
    %v45 = vshrl.u32 %v43, 16
    %v46 = vshrl.u32 %v44, 16
    %v47 = vxor.u32 %v43, %v45
    %v48 = vxor.u32 %v44, %v46
    %v49 = vmul.u32 %v47, 2246822507
    %v50 = vmul.u32 %v48, 2246822507
    %v51 = vshrl.u32 %v49, 13
    %v52 = vshrl.u32 %v50, 13
    %v53 = vxor.u32 %v49, %v51
    %v54 = vxor.u32 %v50, %v52
    %v55 = vmul.u32 %v53, 3266489909
    %v56 = vmul.u32 %v54, 3266489909
    %v57 = vshrl.u32 %v55, 16
    %v58 = vshrl.u32 %v56, 16
    %v59 = vxor.u32 %v55, %v57
    %v60 = vxor.u32 %v56, %v58
    %v61 = vshrl.u32 %v59, 8
    %v62 = vshrl.u32 %v60, 8
    %v63 = vshrl.u32 %v61, 16
    %v64 = vand.u32 %v61, 65535
    %v65 = vcvt.s32.f32 %v63
    %v66 = vmul.f32 %v65, 65536.0
    %v67 = vcvt.s32.f32 %v64
    %v68 = vadd.f32 %v66, %v67
    %v69 = vshrl.u32 %v62, 16
    %v70 = vand.u32 %v62, 65535
    %v71 = vcvt.s32.f32 %v69
    %v72 = vmul.f32 %v71, 65536.0
    %v73 = vcvt.s32.f32 %v70
    %v74 = vadd.f32 %v72, %v73
    %v75 = vmul.f32 %v68, 5.9604645e-08
    %v76 = vmul.f32 %v74, 5.9604645e-08
    %v77 = vadd.f32 %v75, 2.9802322e-08
    %v78 = vadd.f32 %v76, 2.9802322e-08
    %v79 = vadd.s32 %v35, 3327642422
    %v80 = vadd.s32 %v36, 3327642422
    %v81 = vadd.s32 %v79, %v40
    %v82 = vadd.s32 %v80, %v40
    %v83 = vmul.u32 %v81, 2654435769
    %v84 = vmul.u32 %v82, 2654435769
    %v85 = vshrl.u32 %v83, 16
    %v86 = vshrl.u32 %v84, 16
    %v87 = vxor.u32 %v83, %v85
    %v88 = vxor.u32 %v84, %v86
    %v89 = vmul.u32 %v87, 2246822507
    %v90 = vmul.u32 %v88, 2246822507
    %v91 = vshrl.u32 %v89, 13
    %v92 = vshrl.u32 %v90, 13
    %v93 = vxor.u32 %v89, %v91
    %v94 = vxor.u32 %v90, %v92
    %v95 = vmul.u32 %v93, 3266489909
    %v96 = vmul.u32 %v94, 3266489909
    %v97 = vshrl.u32 %v95, 16
    %v98 = vshrl.u32 %v96, 16
    %v99 = vxor.u32 %v95, %v97
    %v100 = vxor.u32 %v96, %v98
    %v101 = vshrl.u32 %v99, 8
    %v102 = vshrl.u32 %v100, 8
    %v103 = vshrl.u32 %v101, 16
    %v104 = vand.u32 %v101, 65535
    %v105 = vcvt.s32.f32 %v103
    %v106 = vmul.f32 %v105, 65536.0
    %v107 = vcvt.s32.f32 %v104
    %v108 = vadd.f32 %v106, %v107
    %v109 = vshrl.u32 %v102, 16
    %v110 = vand.u32 %v102, 65535
    %v111 = vcvt.s32.f32 %v109
    %v112 = vmul.f32 %v111, 65536.0
    %v113 = vcvt.s32.f32 %v110
    %v114 = vadd.f32 %v112, %v113
    %v115 = vmul.f32 %v108, 5.9604645e-08
    %v116 = vmul.f32 %v114, 5.9604645e-08
    %v117 = vlog2.pop %v77
    %v118 = vmul.f32 %v117, 0.6931472
    %v119 = vlog2.pop %v78
    %v120 = vmul.f32 %v119, 0.6931472
    %v121 = vmul.f32 %v118, -2.0
    %v122 = vmul.f32 %v120, -2.0
    %v123 = vrsqrt.pop %v121
    %v124 = vmul.f32 %v121, %v123
    %vm125 = vcmp.eq.f32.partialorder %v121, inf
    %v126 = vsel %vm125, %v121, %v124
    %vm127 = vcmp.eq.f32.partialorder %v121, 0.0
    %v128 = vand.u32 %v121, 2147483648
    %v129 = vsel %vm127, %v128, %v126
    %v130 = vrsqrt.pop %v122
    %v131 = vmul.f32 %v122, %v130
    %vm132 = vcmp.eq.f32.partialorder %v122, inf
    %v133 = vsel %vm132, %v122, %v131
    %vm134 = vcmp.eq.f32.partialorder %v122, 0.0
    %v135 = vand.u32 %v122, 2147483648
    %v136 = vsel %vm134, %v135, %v133
    %v137 = vmul.f32 %v115, 6.2831855
    %v138 = vmul.f32 %v116, 6.2831855
    %v139 = vand.u32 2147483647, %v137
    %vm140 = vcmp.le.f32.partialorder %v139, 0.7853982
    %vm141 = vcmp.lt.s32.totalorder %v137, 0
    %v142 = vand.u32 %v137, 2139095040
    %v143 = vshrl.u32 %v142, 23
    %v144 = vsub.s32 %v143, 127
    %v145 = vand.u32 2147483647, %v137
    %v146 = vand.u32 %v145, 8388607
    %v147 = vor.u32 %v146, 8388608
    %v148 = vsub.s32 0, %v147
    %v149 = vadd.s32 %v144, 1
    %vm150 = vcmp.gt.s32.totalorder %v149, 0
    %v151 = vsel %vm150, %v149, 0
    %v152 = vshrl.u32 %v151, 5
    %v153 = vand.u32 %v151, 31
    %v154 = vsub.s32 32, %v153
    %v155 = vshrl.u32 683565275, %v154
    %v156 = vshll.u32 683565275, %v153
    %v157 = vshrl.u32 2475754826, %v154
    %v158 = vor.u32 %v156, %v157
    %v159 = vshll.u32 2475754826, %v153
    %v160 = vshrl.u32 2131351028, %v154
    %v161 = vor.u32 %v159, %v160
    %v162 = vshll.u32 2131351028, %v153
    %v163 = vshrl.u32 2102212464, %v154
    %v164 = vor.u32 %v162, %v163
    %v165 = vshll.u32 2102212464, %v153
    %v166 = vshrl.u32 920167782, %v154
    %v167 = vor.u32 %v165, %v166
    %v168 = vshll.u32 920167782, %v153
    %v169 = vshrl.u32 1326507024, %v154
    %v170 = vor.u32 %v168, %v169
    %vm171 = vcmp.lt.s32.totalorder %v152, 1
    %vm172 = vcmp.lt.s32.totalorder %v152, 2
    %vm173 = vcmp.lt.s32.totalorder %v152, 3
    %vm174 = vcmp.lt.s32.totalorder %v152, 4
    %v175 = vsel %vm171, %v155, %v158
    %v176 = vsel %vm174, %v164, 2102212464
    %v177 = vsel %vm173, %v161, %v176
    %v178 = vsel %vm172, %v175, %v177
    %v179 = vsel %vm171, %v158, %v161
    %v180 = vsel %vm174, %v167, 920167782
    %v181 = vsel %vm173, %v164, %v180
    %v182 = vsel %vm172, %v179, %v181
    %v183 = vsel %vm171, %v161, %v164
    %v184 = vsel %vm174, %v170, 1326507024
    %v185 = vsel %vm173, %v167, %v184
    %v186 = vsel %vm172, %v183, %v185
    %v187 = vshll.u32 %v147, 8
    %v188 = vmul.u32.u64.compose %v187, %v186
    %v189 = vextract.low.u32 %v188
    %v190 = vextract.high.u32 %v188
    %v191 = vmul.u32.u64.compose %v187, %v182
    %v192 = vextract.low.u32 %v191
    %v193 = vextract.high.u32 %v191
    %v194 = vmul.u32 %v187, %v178
    %v195 = vadd.s32 %v190, %v192
    %vm196 = vc.u32 %v190, %v192
    %v197 = vadd.s32 %v193, 1
    %v198 = vsel %vm196, %v197, %v193
    %v199 = vadd.s32 %v194, %v198
    %v200 = vadd.s32 %v199, 536870912
    %v201 = vshrl.u32 %v200, 30
    %v202 = vshll.u32 %v201, 30
    %v203 = vsub.s32 %v199, %v202
    %vm204 = vcmp.lt.s32.totalorder %v203, 0
    %v205 = vsub.s32 0, %v203
    %v206 = vsel %vm204, %v205, %v203
    %v207 = vclz %v206
    %v208 = vsub.s32 %v207, 2
    %vm209 = vcmp.gt.s32.totalorder 0, %v208
    %v210 = vsel %vm209, 0, %v208
    %v211 = vsub.s32 32, %v210
    %v212 = vshll.u32 %v203, %v210
    %v213 = vshrl.u32 %v195, %v211
    %v214 = vor.u32 %v212, %v213
    %v215 = vsub.s32 4294967266, %v210
    %v216 = vadd.s32 %v215, 127
    %v217 = vshll.u32 %v216, 23
    %v218 = vor.u32 4788187, %v217
    %v219 = vand.u32 2147483647, %v218
    %v221 = vcvt.s32.f32 %v214
    %v222 = vmul.f32 %v221, %v219
    %v223 = vxor.u32 %v222, 2147483648
    %v224 = vsel %vm141, %v223, %v222
    %v225 = vsub.s32 4, %v201
    %v226 = vsel %vm141, %v225, %v201
    %v227 = vsel %vm140, %v137, %v224
    %v228 = vsel %vm140, 0, %v226
    %v229 = vcosq.f32.pop %v227
    %v230 = vsinq.f32.pop %v227
    %vm231 = vweird.f32 %v137
    %v232 = vand.u32 %v228, 3
    %vm233 = vcmp.lt.s32.totalorder %v232, 2
    %vm234 = vcmp.eq.s32.totalorder %v232, 0
    %v235 = vxor.u32 %v230, 2147483648
    %v236 = vsel %vm234, %v229, %v235
    %vm237 = vcmp.eq.s32.totalorder %v232, 2
    %v238 = vxor.u32 %v229, 2147483648
    %v239 = vsel %vm237, %v238, %v230
    %v240 = vsel %vm233, %v236, %v239
    %v241 = vsel %vm231, nan, %v240
    %v242 = vand.u32 2147483647, %v138
    %vm243 = vcmp.le.f32.partialorder %v242, 0.7853982
    %vm244 = vcmp.lt.s32.totalorder %v138, 0
    %v245 = vand.u32 %v138, 2139095040
    %v246 = vshrl.u32 %v245, 23
    %v247 = vsub.s32 %v246, 127
    %v248 = vand.u32 2147483647, %v138
    %v249 = vand.u32 %v248, 8388607
    %v250 = vor.u32 %v249, 8388608
    %v251 = vsub.s32 0, %v250
    %v252 = vadd.s32 %v247, 1
    %vm253 = vcmp.gt.s32.totalorder %v252, 0
    %v254 = vsel %vm253, %v252, 0
    %v255 = vshrl.u32 %v254, 5
    %v256 = vand.u32 %v254, 31
    %v257 = vsub.s32 32, %v256
    %v258 = vshrl.u32 683565275, %v257
    %v259 = vshll.u32 683565275, %v256
    %v260 = vshrl.u32 2475754826, %v257
    %v261 = vor.u32 %v259, %v260
    %v262 = vshll.u32 2475754826, %v256
    %v263 = vshrl.u32 2131351028, %v257
    %v264 = vor.u32 %v262, %v263
    %v265 = vshll.u32 2131351028, %v256
    %v266 = vshrl.u32 2102212464, %v257
    %v267 = vor.u32 %v265, %v266
    %v268 = vshll.u32 2102212464, %v256
    %v269 = vshrl.u32 920167782, %v257
    %v270 = vor.u32 %v268, %v269
    %v271 = vshll.u32 920167782, %v256
    %v272 = vshrl.u32 1326507024, %v257
    %v273 = vor.u32 %v271, %v272
    %vm274 = vcmp.lt.s32.totalorder %v255, 1
    %vm275 = vcmp.lt.s32.totalorder %v255, 2
    %vm276 = vcmp.lt.s32.totalorder %v255, 3
    %vm277 = vcmp.lt.s32.totalorder %v255, 4
    %v278 = vsel %vm274, %v258, %v261
    %v279 = vsel %vm277, %v267, 2102212464
    %v280 = vsel %vm276, %v264, %v279
    %v281 = vsel %vm275, %v278, %v280
    %v282 = vsel %vm274, %v261, %v264
    %v283 = vsel %vm277, %v270, 920167782
    %v284 = vsel %vm276, %v267, %v283
    %v285 = vsel %vm275, %v282, %v284
    %v286 = vsel %vm274, %v264, %v267
    %v287 = vsel %vm277, %v273, 1326507024
    %v288 = vsel %vm276, %v270, %v287
    %v289 = vsel %vm275, %v286, %v288
    %v290 = vshll.u32 %v250, 8
    %v291 = vmul.u32.u64.compose %v290, %v289
    %v292 = vextract.low.u32 %v291
    %v293 = vextract.high.u32 %v291
    %v294 = vmul.u32.u64.compose %v290, %v285
    %v295 = vextract.low.u32 %v294
    %v296 = vextract.high.u32 %v294
    %v297 = vmul.u32 %v290, %v281
    %v298 = vadd.s32 %v293, %v295
    %vm299 = vc.u32 %v293, %v295
    %v300 = vadd.s32 %v296, 1
    %v301 = vsel %vm299, %v300, %v296
    %v302 = vadd.s32 %v297, %v301
    %v303 = vadd.s32 %v302, 536870912
    %v304 = vshrl.u32 %v303, 30
    %v305 = vshll.u32 %v304, 30
    %v306 = vsub.s32 %v302, %v305
    %vm307 = vcmp.lt.s32.totalorder %v306, 0
    %v308 = vsub.s32 0, %v306
    %v309 = vsel %vm307, %v308, %v306
    %v310 = vclz %v309
    %v311 = vsub.s32 %v310, 2
    %vm312 = vcmp.gt.s32.totalorder 0, %v311
    %v313 = vsel %vm312, 0, %v311
    %v314 = vsub.s32 32, %v313
    %v315 = vshll.u32 %v306, %v313
    %v316 = vshrl.u32 %v298, %v314
    %v317 = vor.u32 %v315, %v316
    %v318 = vsub.s32 4294967266, %v313
    %v319 = vadd.s32 %v318, 127
    %v320 = vshll.u32 %v319, 23
    %v321 = vor.u32 4788187, %v320
    %v322 = vand.u32 2147483647, %v321
    %v324 = vcvt.s32.f32 %v317
    %v325 = vmul.f32 %v324, %v322
    %v326 = vxor.u32 %v325, 2147483648
    %v327 = vsel %vm244, %v326, %v325
    %v328 = vsub.s32 4, %v304
    %v329 = vsel %vm244, %v328, %v304
    %v330 = vsel %vm243, %v138, %v327
    %v331 = vsel %vm243, 0, %v329
    %v332 = vcosq.f32.pop %v330
    %v333 = vsinq.f32.pop %v330
    %vm334 = vweird.f32 %v138
    %v335 = vand.u32 %v331, 3
    %vm336 = vcmp.lt.s32.totalorder %v335, 2
    %vm337 = vcmp.eq.s32.totalorder %v335, 0
    %v338 = vxor.u32 %v333, 2147483648
    %v339 = vsel %vm337, %v332, %v338
    %vm340 = vcmp.eq.s32.totalorder %v335, 2
    %v341 = vxor.u32 %v332, 2147483648
    %v342 = vsel %vm340, %v341, %v333
    %v343 = vsel %vm336, %v339, %v342
    %v344 = vsel %vm334, nan, %v343
    %v345 = vmul.f32 %v129, %v241
    %v346 = vmul.f32 %v136, %v344
    %v347 = vand.u32 2147483647, %v137
    %vm348 = vcmp.le.f32.partialorder %v347, 0.7853982
    %vm349 = vcmp.lt.s32.totalorder %v137, 0
    %v350 = vand.u32 %v137, 2139095040
    %v351 = vshrl.u32 %v350, 23
    %v352 = vsub.s32 %v351, 127
    %v353 = vand.u32 2147483647, %v137
    %v354 = vand.u32 %v353, 8388607
    %v355 = vor.u32 %v354, 8388608
    %v356 = vsub.s32 0, %v355
    %v357 = vadd.s32 %v352, 1
    %vm358 = vcmp.gt.s32.totalorder %v357, 0
    %v359 = vsel %vm358, %v357, 0
    %v360 = vshrl.u32 %v359, 5
    %v361 = vand.u32 %v359, 31
    %v362 = vsub.s32 32, %v361
    %v363 = vshrl.u32 683565275, %v362
    %v364 = vshll.u32 683565275, %v361
    %v365 = vshrl.u32 2475754826, %v362
    %v366 = vor.u32 %v364, %v365
    %v367 = vshll.u32 2475754826, %v361
    %v368 = vshrl.u32 2131351028, %v362
    %v369 = vor.u32 %v367, %v368
    %v370 = vshll.u32 2131351028, %v361
    %v371 = vshrl.u32 2102212464, %v362
    %v372 = vor.u32 %v370, %v371
    %v373 = vshll.u32 2102212464, %v361
    %v374 = vshrl.u32 920167782, %v362
    %v375 = vor.u32 %v373, %v374
    %v376 = vshll.u32 920167782, %v361
    %v377 = vshrl.u32 1326507024, %v362
    %v378 = vor.u32 %v376, %v377
    %vm379 = vcmp.lt.s32.totalorder %v360, 1
    %vm380 = vcmp.lt.s32.totalorder %v360, 2
    %vm381 = vcmp.lt.s32.totalorder %v360, 3
    %vm382 = vcmp.lt.s32.totalorder %v360, 4
    %v383 = vsel %vm379, %v363, %v366
    %v384 = vsel %vm382, %v372, 2102212464
    %v385 = vsel %vm381, %v369, %v384
    %v386 = vsel %vm380, %v383, %v385
    %v387 = vsel %vm379, %v366, %v369
    %v388 = vsel %vm382, %v375, 920167782
    %v389 = vsel %vm381, %v372, %v388
    %v390 = vsel %vm380, %v387, %v389
    %v391 = vsel %vm379, %v369, %v372
    %v392 = vsel %vm382, %v378, 1326507024
    %v393 = vsel %vm381, %v375, %v392
    %v394 = vsel %vm380, %v391, %v393
    %v395 = vshll.u32 %v355, 8
    %v396 = vmul.u32.u64.compose %v395, %v394
    %v397 = vextract.low.u32 %v396
    %v398 = vextract.high.u32 %v396
    %v399 = vmul.u32.u64.compose %v395, %v390
    %v400 = vextract.low.u32 %v399
    %v401 = vextract.high.u32 %v399
    %v402 = vmul.u32 %v395, %v386
    %v403 = vadd.s32 %v398, %v400
    %vm404 = vc.u32 %v398, %v400
    %v405 = vadd.s32 %v401, 1
    %v406 = vsel %vm404, %v405, %v401
    %v407 = vadd.s32 %v402, %v406
    %v408 = vadd.s32 %v407, 536870912
    %v409 = vshrl.u32 %v408, 30
    %v410 = vshll.u32 %v409, 30
    %v411 = vsub.s32 %v407, %v410
    %vm412 = vcmp.lt.s32.totalorder %v411, 0
    %v413 = vsub.s32 0, %v411
    %v414 = vsel %vm412, %v413, %v411
    %v415 = vclz %v414
    %v416 = vsub.s32 %v415, 2
    %vm417 = vcmp.gt.s32.totalorder 0, %v416
    %v418 = vsel %vm417, 0, %v416
    %v419 = vsub.s32 32, %v418
    %v420 = vshll.u32 %v411, %v418
    %v421 = vshrl.u32 %v403, %v419
    %v422 = vor.u32 %v420, %v421
    %v423 = vsub.s32 4294967266, %v418
    %v424 = vadd.s32 %v423, 127
    %v425 = vshll.u32 %v424, 23
    %v426 = vor.u32 4788187, %v425
    %v427 = vand.u32 2147483647, %v426
    %v429 = vcvt.s32.f32 %v422
    %v430 = vmul.f32 %v429, %v427
    %v431 = vxor.u32 %v430, 2147483648
    %v432 = vsel %vm349, %v431, %v430
    %v433 = vsub.s32 4, %v409
    %v434 = vsel %vm349, %v433, %v409
    %v435 = vsel %vm348, %v137, %v432
    %v436 = vsel %vm348, 0, %v434
    %v437 = vcosq.f32.pop %v435
    %v438 = vsinq.f32.pop %v435
    %vm439 = vweird.f32 %v137
    %v440 = vadd.s32 %v436, 3
    %v441 = vand.u32 %v440, 3
    %vm442 = vcmp.lt.s32.totalorder %v441, 2
    %vm443 = vcmp.eq.s32.totalorder %v441, 0
    %v444 = vxor.u32 %v438, 2147483648
    %v445 = vsel %vm443, %v437, %v444
    %vm446 = vcmp.eq.s32.totalorder %v441, 2
    %v447 = vxor.u32 %v437, 2147483648
    %v448 = vsel %vm446, %v447, %v438
    %v449 = vsel %vm442, %v445, %v448
    %v450 = vsel %vm439, nan, %v449
    %v451 = vand.u32 2147483647, %v138
    %vm452 = vcmp.le.f32.partialorder %v451, 0.7853982
    %vm453 = vcmp.lt.s32.totalorder %v138, 0
    %v454 = vand.u32 %v138, 2139095040
    %v455 = vshrl.u32 %v454, 23
    %v456 = vsub.s32 %v455, 127
    %v457 = vand.u32 2147483647, %v138
    %v458 = vand.u32 %v457, 8388607
    %v459 = vor.u32 %v458, 8388608
    %v460 = vsub.s32 0, %v459
    %v461 = vadd.s32 %v456, 1
    %vm462 = vcmp.gt.s32.totalorder %v461, 0
    %v463 = vsel %vm462, %v461, 0
    %v464 = vshrl.u32 %v463, 5
    %v465 = vand.u32 %v463, 31
    %v466 = vsub.s32 32, %v465
    %v467 = vshrl.u32 683565275, %v466
    %v468 = vshll.u32 683565275, %v465
    %v469 = vshrl.u32 2475754826, %v466
    %v470 = vor.u32 %v468, %v469
    %v471 = vshll.u32 2475754826, %v465
    %v472 = vshrl.u32 2131351028, %v466
    %v473 = vor.u32 %v471, %v472
    %v474 = vshll.u32 2131351028, %v465
    %v475 = vshrl.u32 2102212464, %v466
    %v476 = vor.u32 %v474, %v475
    %v477 = vshll.u32 2102212464, %v465
    %v478 = vshrl.u32 920167782, %v466
    %v479 = vor.u32 %v477, %v478
    %v480 = vshll.u32 920167782, %v465
    %v481 = vshrl.u32 1326507024, %v466
    %v482 = vor.u32 %v480, %v481
    %vm483 = vcmp.lt.s32.totalorder %v464, 1
    %vm484 = vcmp.lt.s32.totalorder %v464, 2
    %vm485 = vcmp.lt.s32.totalorder %v464, 3
    %vm486 = vcmp.lt.s32.totalorder %v464, 4
    %v487 = vsel %vm483, %v467, %v470
    %v488 = vsel %vm486, %v476, 2102212464
    %v489 = vsel %vm485, %v473, %v488
    %v490 = vsel %vm484, %v487, %v489
    %v491 = vsel %vm483, %v470, %v473
    %v492 = vsel %vm486, %v479, 920167782
    %v493 = vsel %vm485, %v476, %v492
    %v494 = vsel %vm484, %v491, %v493
    %v495 = vsel %vm483, %v473, %v476
    %v496 = vsel %vm486, %v482, 1326507024
    %v497 = vsel %vm485, %v479, %v496
    %v498 = vsel %vm484, %v495, %v497
    %v499 = vshll.u32 %v459, 8
    %v500 = vmul.u32.u64.compose %v499, %v498
    %v501 = vextract.low.u32 %v500
    %v502 = vextract.high.u32 %v500
    %v503 = vmul.u32.u64.compose %v499, %v494
    %v504 = vextract.low.u32 %v503
    %v505 = vextract.high.u32 %v503
    %v506 = vmul.u32 %v499, %v490
    %v507 = vadd.s32 %v502, %v504
    %vm508 = vc.u32 %v502, %v504
    %v509 = vadd.s32 %v505, 1
    %v510 = vsel %vm508, %v509, %v505
    %v511 = vadd.s32 %v506, %v510
    %v512 = vadd.s32 %v511, 536870912
    %v513 = vshrl.u32 %v512, 30
    %v514 = vshll.u32 %v513, 30
    %v515 = vsub.s32 %v511, %v514
    %vm516 = vcmp.lt.s32.totalorder %v515, 0
    %v517 = vsub.s32 0, %v515
    %v518 = vsel %vm516, %v517, %v515
    %v519 = vclz %v518
    %v520 = vsub.s32 %v519, 2
    %vm521 = vcmp.gt.s32.totalorder 0, %v520
    %v522 = vsel %vm521, 0, %v520
    %v523 = vsub.s32 32, %v522
    %v524 = vshll.u32 %v515, %v522
    %v525 = vshrl.u32 %v507, %v523
    %v526 = vor.u32 %v524, %v525
    %v527 = vsub.s32 4294967266, %v522
    %v528 = vadd.s32 %v527, 127
    %v529 = vshll.u32 %v528, 23
    %v530 = vor.u32 4788187, %v529
    %v531 = vand.u32 2147483647, %v530
    %v533 = vcvt.s32.f32 %v526
    %v534 = vmul.f32 %v533, %v531
    %v535 = vxor.u32 %v534, 2147483648
    %v536 = vsel %vm453, %v535, %v534
    %v537 = vsub.s32 4, %v513
    %v538 = vsel %vm453, %v537, %v513
    %v539 = vsel %vm452, %v138, %v536
    %v540 = vsel %vm452, 0, %v538
    %v541 = vcosq.f32.pop %v539
    %v542 = vsinq.f32.pop %v539
    %vm543 = vweird.f32 %v138
    %v544 = vadd.s32 %v540, 3
    %v545 = vand.u32 %v544, 3
    %vm546 = vcmp.lt.s32.totalorder %v545, 2
    %vm547 = vcmp.eq.s32.totalorder %v545, 0
    %v548 = vxor.u32 %v542, 2147483648
    %v549 = vsel %vm547, %v541, %v548
    %vm550 = vcmp.eq.s32.totalorder %v545, 2
    %v551 = vxor.u32 %v541, 2147483648
    %v552 = vsel %vm550, %v551, %v542
    %v553 = vsel %vm546, %v549, %v552
    %v554 = vsel %vm543, nan, %v553
    %v555 = vmul.f32 %v129, %v450
    %v556 = vmul.f32 %v136, %v554
    %v559 = vrot.slane %v555, 4
    %v560 = vrot.slane %v556, 4
    %vm563 = vcmask 1043456
    %v564 = vsel %vm563, %v345, %v559
    %v565 = vsel %vm563, %v346, %v560
    %v566 = vld [vmem:[#allocation4] sm:$0xff]
    %v567 = vld [vmem:[#allocation4 + $0x8] sm:$0xff]
    %v570 = vcombine.low %v566, %v567
    %v571 = vcombine.high %v566, %v567
    %v574 = vcombine.high %v570, %v570
    %v575 = vcombine.high %v571, %v571
    %v578 = vsel %vm563, %v570, 0.0
    %v579 = vrot.slane %v578, 4
    %v580 = vadd.f32 %v578, %v579
    %v581 = vrot.slane %v580, 2
    %v582 = vadd.f32 %v580, %v581
    %v583 = vrot.slane %v582, 1
    %v584 = vadd.f32 %v582, %v583
    %v585 = vsel %vm563, %v574, 0.0
    %v586 = vrot.slane %v585, 4
    %v587 = vadd.f32 %v585, %v586
    %v588 = vrot.slane %v587, 2
    %v589 = vadd.f32 %v587, %v588
    %v590 = vrot.slane %v589, 1
    %v591 = vadd.f32 %v589, %v590
    %v592 = vsel %vm563, %v571, 0.0
    %v593 = vrot.slane %v592, 4
    %v594 = vadd.f32 %v592, %v593
    %v595 = vrot.slane %v594, 2
    %v596 = vadd.f32 %v594, %v595
    %v597 = vrot.slane %v596, 1
    %v598 = vadd.f32 %v596, %v597
    %v599 = vsel %vm563, %v575, 0.0
    %v600 = vrot.slane %v599, 4
    %v601 = vadd.f32 %v599, %v600
    %v602 = vrot.slane %v601, 2
    %v603 = vadd.f32 %v601, %v602
    %v604 = vrot.slane %v603, 1
    %v605 = vadd.f32 %v603, %v604
    %v606 = vrcp.pop 4.0
    %v607 = vmul.f32 %v584, %v606
    %v608 = vmul.f32 %v591, %v606
    %v609 = vmul.f32 %v598, %v606
    %v610 = vmul.f32 %v605, %v606
    %v611 = vxor.u32 %v607, 2147483648
    %v612 = vxor.u32 %v608, 2147483648
    %v613 = vxor.u32 %v609, 2147483648
    %v614 = vxor.u32 %v610, 2147483648
    %v615 = vmul.f32 %v611, 1.442695
    %v616 = vpow.pop %v615
    %v617 = vmul.f32 %v612, 1.442695
    %v618 = vpow.pop %v617
    %v619 = vmul.f32 %v613, 1.442695
    %v620 = vpow.pop %v619
    %v621 = vmul.f32 %v614, 1.442695
    %v622 = vpow.pop %v621
    %v623 = vadd.f32 %v616, 1.0
    %v624 = vadd.f32 %v618, 1.0
    %v625 = vadd.f32 %v620, 1.0
    %v626 = vadd.f32 %v622, 1.0
    %v627 = vrcp.pop %v623
    %v628 = vmul.f32 1.0, %v627
    %v629 = vrcp.pop %v624
    %v630 = vmul.f32 1.0, %v629
    %v631 = vrcp.pop %v625
    %v632 = vmul.f32 1.0, %v631
    %v633 = vrcp.pop %v626
    %v634 = vmul.f32 1.0, %v633
    %v635 = vmul.f32 %v564, 0.1
    %v636 = vmul.f32 %v565, 0.1
    %v639 = vcombine.low %v635, %v636
    %v640 = vcombine.high %v635, %v636
    %v647 = vcombine.low %v628, %v630
    %v648 = vcombine.low %v632, %v634
    %v651 = vmul.f32 %v639, %v647
    %v652 = vmul.f32 %v640, %v648
    %v653 = vadd.f32 %v570, %v651
    %v654 = vadd.f32 %v571, %v652
    %v657 = vcombine.low %v653, %v654
    %v658 = vcombine.high %v653, %v654
    %661 = vst [vmem:[#allocation7] sm:$0xff] %v657
    %662 = vst [vmem:[#allocation7 + $0x8] sm:$0xff] %v658
    // Predicated region
    $region10: #{tpu_custom_call.1} parent=1 // pred_check
      _
    $region11: #{tpu_custom_call.1} parent=1 // pred_check_branch
      %664 = sbr.rel (0) target = $region13
    $region12: #{tpu_custom_call.1} parent=1 // pred_region
      %s666 = ssub.s32 256, 256
      %667 = vsyncadd [#allocation6], %s666
      %s669 = sshll.u32 [#allocation7], 4
      %s670 = int_to_ptr.vmem [resolvable:$true] %s669
      %672 = dma.vmem_to_hbm [thread:$0]  %s670, 256, %s2, [#allocation6]
    $region13: #{tpu_custom_call.1} parent=1 // pred_fallthru
      _
    // Predicated region
    $region14: #{tpu_custom_call.1} parent=1 // pred_check
      _
    $region15: #{tpu_custom_call.1} parent=1 // pred_check_branch
      %674 = sbr.rel (0) target = $region17
    $region16: #{tpu_custom_call.1} parent=1 // pred_region
      %675 = dma.done [#allocation6], 256
    $region17: #{tpu_custom_call.1} parent=1 // pred_fallthru
      _
    %676 = vsyncpa [#allocation5], 1
    %677 = vsyncpa [#allocation6], 1

</llo_original>
